<compile_context>
chip_gen: v5e
topology: v5e:2x2
jax: 0.10.0
libtpu: 0.0.40
codegen_flags: <defaults>
</compile_context>

<pallas_src>
import functools

import jax
import jax.numpy as jnp
from jax import lax
from jax.experimental import pallas as pl
from jax.experimental.pallas import tpu as pltpu


# ----------------------------------------------------------------------------
# SH coefficients (real spherical harmonics, torch-ngp / tcnn convention)
# ----------------------------------------------------------------------------
C0 = 0.28209479177387814
C1 = 0.48860251190291987
C2_0 = 1.0925484305920792
C2_2 = 0.94617469575755997
C2_2b = 0.31539156525252005
C2_4 = 0.5462742152960396
C3_0 = 0.59004358992664352
C3_1 = 2.8906114426405538
C3_2 = 0.45704579946446572
C3_3 = 0.3731763325901154
C3_5 = 1.445305721320277

LANE = 128          # TPU lane width
SUBLANE = 8         # f32 sublanes per vreg


def _sh_terms_no_dc(x, y, z, degree):
    """SH basis terms for l >= 1 (each same shape as x). torch-ngp formulas."""
    terms = []
    if degree > 1:                                       # l = 1
        terms += [-C1 * y, C1 * z, -C1 * x]
    if degree > 2:                                       # l = 2
        xx, yy, zz = x * x, y * y, z * z
        xy, yz, xz = x * y, y * z, x * z
        terms += [C2_0 * xy, -C2_0 * yz, C2_2 * zz - C2_2b,
                  -C2_0 * xz, C2_4 * (xx - yy)]
    if degree > 3:                                       # l = 3
        terms += [C3_0 * y * (-3.0 * xx + yy), C3_1 * xy * z,
                  C3_2 * y * (1.0 - 5.0 * zz), C3_3 * z * (5.0 * zz - 3.0),
                  C3_2 * x * (1.0 - 5.0 * zz), C3_5 * z * (xx - yy),
                  C3_0 * x * (-xx + 3.0 * yy)]
    return terms


def _sh_kernel(d_ref, out_ref, *, degree, chunk):
    """d_ref: (3, TQ, 128) x/y/z planes; out_ref: (degree**2, TQ, 128).

    Directions are dense over the last two (sublane, lane) dims.  The chunk
    loop keeps register pressure bounded while the DMA block stays large.
    Every output element depends only on its own input element, so OOB rows
    of a ragged last grid block are harmless (dropped on writeback).
    """
    tq = d_ref.shape[1]
    n_chunks = tq // chunk

    # Hoisted constant l=0 plane (loop-invariant; one splat per grid step).
    x0 = d_ref[0, pl.ds(0, chunk), :]
    c0_plane = jnp.full_like(x0, C0).astype(out_ref.dtype)

    def body(i, carry):
        row0 = pl.multiple_of(i * chunk, chunk)
        sl = pl.ds(row0, chunk)
        x = d_ref[0, sl, :]          # (chunk, 128), fully dense vregs
        y = d_ref[1, sl, :]
        z = d_ref[2, sl, :]
        out_ref[0, sl, :] = c0_plane
        # One dense full-width store per SH channel (no lane-axis concat).
        for k, term in enumerate(_sh_terms_no_dc(x, y, z, degree), start=1):
            out_ref[k, sl, :] = term.astype(out_ref.dtype)
        return carry

    lax.fori_loop(0, n_chunks, body, 0)


def _run_lane_dense(d_lane, degree, tile_q, out_dtype):
    """d_lane: (3, q, 128) f32 planes -> (degree**2, q, 128) in out_dtype."""
    q = d_lane.shape[1]
    n_out = degree ** 2
    itemsize = jnp.dtype(out_dtype).itemsize
    # Sublane granularity of an output block row-chunk (16 for bf16, 8 for f32)
    sub_mult = SUBLANE * max(1, 4 // itemsize)

    tq = min(tile_q, q)
    if tq != q and tq % sub_mult:
        tq = pl.cdiv(tq, sub_mult) * sub_mult
    # v7x: make sure the 1-D grid has >= 2 blocks so both TensorCores get work.
    if pl.cdiv(q, tq) < 2 and q >= 2 * sub_mult:
        tq = pl.cdiv(pl.cdiv(q, 2), sub_mult) * sub_mult
    chunk = 16 if tq % 16 == 0 else SUBLANE
    grid = (pl.cdiv(q, tq),)

    n_dirs = q * LANE
    cost = pl.CostEstimate(
        flops=60 * n_dirs,
        transcendentals=0,
        bytes_accessed=n_dirs * (3 * 4 + n_out * itemsize),
    )

    kernel = functools.partial(_sh_kernel, degree=degree, chunk=chunk)
    out = pl.pallas_call(
        kernel,
        out_shape=jax.ShapeDtypeStruct((n_out, q, LANE), out_dtype),
        grid_spec=pltpu.PrefetchScalarGridSpec(
            num_scalar_prefetch=0,
            grid=grid,
            in_specs=[pl.BlockSpec((3, tq, LANE), lambda i: (0, i, 0))],
            out_specs=pl.BlockSpec((n_out, tq, LANE), lambda i: (0, i, 0)),
        ),
        compiler_params=pltpu.CompilerParams(
            dimension_semantics=("parallel",)),
        cost_estimate=cost,
    )(d_lane)
    return out


def _planar_to_lane_dense(d_planar):
    """(3, N) f32 -> ((3, q, 128), N) padded to a 1024-direction boundary."""
    n = d_planar.shape[1]
    n_pad = pl.cdiv(n, SUBLANE * LANE) * (SUBLANE * LANE)
    d_pl = d_planar.astype(jnp.float32)
    if n_pad != n:
        d_pl = jnp.pad(d_pl, ((0, 0), (0, n_pad - n)))
    return d_pl.reshape(3, n_pad // LANE, LANE), n


@functools.partial(jax.jit, static_argnames=("degree", "tile_q", "out_dtype"))
def sh_encode_from_planar(dirs_planar, *, degree: int = 4, tile_q: int = 512,
                          out_dtype=jnp.float32):
    """SoA input (3, N) -> channel-major (degree**2, N). No transposes at all."""
    assert dirs_planar.ndim == 2 and dirs_planar.shape[0] == 3
    assert 1 <= degree <= 4
    d_lane, n = _planar_to_lane_dense(dirs_planar)
    out = _run_lane_dense(d_lane, degree, tile_q, out_dtype)
    q = d_lane.shape[1]
    return out.reshape(degree ** 2, q * LANE)[:, :n]


@functools.partial(jax.jit, static_argnames=("degree", "tile_q", "out_dtype"))
def sh_encode_channel_major(dirs, *, degree: int = 4, tile_q: int = 512,
                            out_dtype=jnp.float32):
    """(N, 3) -> channel-major (degree**2, N). Primary (transpose-free) API.

    Only layout cost beyond the kernel is the (N,3)->(3,N) planar copy (pad
    and reshape fuse into it).
    """
    assert dirs.ndim == 2 and dirs.shape[-1] == 3
    return sh_encode_from_planar(dirs.astype(jnp.float32).T, degree=degree,
                                 tile_q=tile_q, out_dtype=out_dtype)


@functools.partial(jax.jit, static_argnames=("degree", "tile_q", "out_dtype"))
def sh_encode(dirs, *, degree: int = 4, tile_q: int = 512,
              out_dtype=jnp.float32):
    """Matches the PyTorch module: (N, 3) -> (N, degree**2) row-major.

    Pays exactly one fused slice+transpose of the (16, N) kernel output.
    Prefer sh_encode_channel_major / sh_encode_from_planar when the consumer
    can take channel-major planes directly.
    """
    out_cm = sh_encode_channel_major(dirs, degree=degree, tile_q=tile_q,
                                     out_dtype=out_dtype)
    return out_cm.T


# ----------------------------------------------------------------------------
# Pure-JAX reference (same formulas) for correctness checking.
# ----------------------------------------------------------------------------
def sh_encode_ref(d, degree=4):
    x, y, z = d[:, 0:1], d[:, 1:2], d[:, 2:3]
    cols = [jnp.full_like(x, C0)]
    if degree > 1:
        cols += [-C1 * y, C1 * z, -C1 * x]
    if degree > 2:
        xx, yy, zz = x * x, y * y, z * z
        xy, yz, xz = x * y, y * z, x * z
        cols += [C2_0 * xy, -C2_0 * yz, C2_2 * zz - C2_2b,
                 -C2_0 * xz, C2_4 * (xx - yy)]
    if degree > 3:
        cols += [C3_0 * y * (-3.0 * xx + yy), C3_1 * xy * z,
                 C3_2 * y * (1.0 - 5.0 * zz), C3_3 * z * (5.0 * zz - 3.0),
                 C3_2 * x * (1.0 - 5.0 * zz), C3_5 * z * (xx - yy),
                 C3_0 * x * (-xx + 3.0 * yy)]
    return jnp.concatenate(cols, axis=-1)


if __name__ == "__main__":
    key = jax.random.PRNGKey(0)
    degree = 4

    # Aligned batch of unit direction vectors (q=32 -> clamped to 2 grid blocks).
    n1 = 4096
    raw = jax.random.normal(key, (n1, 3), dtype=jnp.float32)
    dirs = raw / jnp.linalg.norm(raw, axis=-1, keepdims=True)
    ref = sh_encode_ref(dirs, degree=degree)

    # 1) Module-compatible row-major output.
    out = jax.block_until_ready(sh_encode(dirs, degree=degree))
    assert out.shape == (n1, degree ** 2)
    assert float(jnp.max(jnp.abs(out - ref))) < 1e-5

    # 2) Primary channel-major (transpose-free) path.
    out_cm = jax.block_until_ready(sh_encode_channel_major(dirs, degree=degree))
    assert out_cm.shape == (degree ** 2, n1)
    assert float(jnp.max(jnp.abs(out_cm.T - ref))) < 1e-5

    # 3) SoA (3, N) input path (skips the input-side transpose entirely).
    out_pl = jax.block_until_ready(sh_encode_from_planar(dirs.T, degree=degree))
    assert float(jnp.max(jnp.abs(out_pl.T - ref))) < 1e-5

    # 4) bf16 output (f32 math, cast at store) — opt-in, looser tolerance.
    out_bf = jax.block_until_ready(
        sh_encode_channel_major(dirs, degree=degree, out_dtype=jnp.bfloat16))
    assert out_bf.dtype == jnp.bfloat16
    assert float(jnp.max(jnp.abs(out_bf.astype(jnp.float32).T - ref))) < 2e-2

    # 5) Ragged batch (exercises the pad / masked-tail / slice path).
    n2 = 1000
    dirs2 = dirs[:n2]
    out2 = jax.block_until_ready(sh_encode(dirs2, degree=degree))
    ref2 = sh_encode_ref(dirs2, degree=degree)
    assert out2.shape == (n2, degree ** 2)
    assert float(jnp.max(jnp.abs(out2 - ref2))) < 1e-5

    print("KERNEL_OK")
</pallas_src>

<mosaic_0001>
module attributes {stable_mosaic.version = 11 : i64} {
  func.func @_sh_kernel(%arg0: i32, %arg1: memref<3x16x128xf32, #tpu.memory_space<vmem>>, %arg2: memref<16x16x128xf32, #tpu.memory_space<vmem>>) attributes {dimension_semantics = [#tpu.dimension_semantics<parallel>], iteration_bounds = array<i64: 2>, scalar_prefetch = 0 : i64, scratch_operands = 0 : i64, tpu.core_type = #tpu.core_type<tc>, window_params = [{transform_indices = @transform_0, window_bounds = array<i64: 3, 16, 128>}, {transform_indices = @transform_1, window_bounds = array<i64: 16, 16, 128>}]} {
    %cst = arith.constant 0.282094806 : f32
    %0 = vector.broadcast %cst : f32 to vector<16x128xf32>
    %c0_i32 = arith.constant 0 : i32
    %c16_i32 = arith.constant 16 : i32
    %1 = arith.muli %c0_i32, %c16_i32 : i32
    %2 = tpu.assume_multiple %1, 16 : i32
    %c0 = arith.constant 0 : index
    %3 = arith.index_cast %2 : i32 to index
    %c0_0 = arith.constant 0 : index
    %4 = vector.load %arg1[%c0, %3, %c0_0] : memref<3x16x128xf32, #tpu.memory_space<vmem>>, vector<1x16x128xf32>
    %5 = vector.shape_cast %4 : vector<1x16x128xf32> to vector<16x128xf32>
    %c1 = arith.constant 1 : index
    %6 = arith.index_cast %2 : i32 to index
    %c0_1 = arith.constant 0 : index
    %7 = vector.load %arg1[%c1, %6, %c0_1] : memref<3x16x128xf32, #tpu.memory_space<vmem>>, vector<1x16x128xf32>
    %8 = vector.shape_cast %7 : vector<1x16x128xf32> to vector<16x128xf32>
    %c2 = arith.constant 2 : index
    %9 = arith.index_cast %2 : i32 to index
    %c0_2 = arith.constant 0 : index
    %10 = vector.load %arg1[%c2, %9, %c0_2] : memref<3x16x128xf32, #tpu.memory_space<vmem>>, vector<1x16x128xf32>
    %11 = vector.shape_cast %10 : vector<1x16x128xf32> to vector<16x128xf32>
    %c0_3 = arith.constant 0 : index
    %12 = arith.index_cast %2 : i32 to index
    %c0_4 = arith.constant 0 : index
    %13 = vector.load %arg2[%c0_3, %12, %c0_4] : memref<16x16x128xf32, #tpu.memory_space<vmem>>, vector<1x16x128xf32>
    %14 = vector.shape_cast %13 : vector<1x16x128xf32> to vector<16x128xf32>
    %15 = vector.shape_cast %0 : vector<16x128xf32> to vector<1x16x128xf32>
    tpu.vector_store %arg2[%c0_3, %12, %c0_4], %15 {strides = array<i32>} : memref<16x16x128xf32, #tpu.memory_space<vmem>>, vector<1x16x128xf32>,
    %cst_5 = arith.constant -0.488602519 : f32
    %16 = vector.broadcast %cst_5 : f32 to vector<16x128xf32>
    %17 = arith.mulf %16, %8 : vector<16x128xf32>
    %cst_6 = arith.constant 0.488602519 : f32
    %18 = vector.broadcast %cst_6 : f32 to vector<16x128xf32>
    %19 = arith.mulf %18, %11 : vector<16x128xf32>
    %cst_7 = arith.constant -0.488602519 : f32
    %20 = vector.broadcast %cst_7 : f32 to vector<16x128xf32>
    %21 = arith.mulf %20, %5 : vector<16x128xf32>
    %22 = arith.mulf %5, %5 : vector<16x128xf32>
    %23 = arith.mulf %8, %8 : vector<16x128xf32>
    %24 = arith.mulf %11, %11 : vector<16x128xf32>
    %25 = arith.mulf %5, %8 : vector<16x128xf32>
    %26 = arith.mulf %8, %11 : vector<16x128xf32>
    %27 = arith.mulf %5, %11 : vector<16x128xf32>
    %cst_8 = arith.constant 1.09254849 : f32
    %28 = vector.broadcast %cst_8 : f32 to vector<16x128xf32>
    %29 = arith.mulf %28, %25 : vector<16x128xf32>
    %cst_9 = arith.constant -1.09254849 : f32
    %30 = vector.broadcast %cst_9 : f32 to vector<16x128xf32>
    %31 = arith.mulf %30, %26 : vector<16x128xf32>
    %cst_10 = arith.constant 0.946174681 : f32
    %32 = vector.broadcast %cst_10 : f32 to vector<16x128xf32>
    %33 = arith.mulf %32, %24 : vector<16x128xf32>
    %cst_11 = arith.constant 0.31539157 : f32
    %34 = vector.broadcast %cst_11 : f32 to vector<16x128xf32>
    %35 = arith.subf %33, %34 : vector<16x128xf32>
    %cst_12 = arith.constant -1.09254849 : f32
    %36 = vector.broadcast %cst_12 : f32 to vector<16x128xf32>
    %37 = arith.mulf %36, %27 : vector<16x128xf32>
    %38 = arith.subf %22, %23 : vector<16x128xf32>
    %cst_13 = arith.constant 0.546274245 : f32
    %39 = vector.broadcast %cst_13 : f32 to vector<16x128xf32>
    %40 = arith.mulf %39, %38 : vector<16x128xf32>
    %cst_14 = arith.constant 0.590043604 : f32
    %41 = vector.broadcast %cst_14 : f32 to vector<16x128xf32>
    %42 = arith.mulf %41, %8 : vector<16x128xf32>
    %cst_15 = arith.constant -3.000000e+00 : f32
    %43 = vector.broadcast %cst_15 : f32 to vector<16x128xf32>
    %44 = arith.mulf %43, %22 : vector<16x128xf32>
    %45 = arith.addf %44, %23 : vector<16x128xf32>
    %46 = arith.mulf %42, %45 : vector<16x128xf32>
    %cst_16 = arith.constant 2.89061141 : f32
    %47 = vector.broadcast %cst_16 : f32 to vector<16x128xf32>
    %48 = arith.mulf %47, %25 : vector<16x128xf32>
    %49 = arith.mulf %48, %11 : vector<16x128xf32>
    %cst_17 = arith.constant 0.457045794 : f32
    %50 = vector.broadcast %cst_17 : f32 to vector<16x128xf32>
    %51 = arith.mulf %50, %8 : vector<16x128xf32>
    %cst_18 = arith.constant 5.000000e+00 : f32
    %52 = vector.broadcast %cst_18 : f32 to vector<16x128xf32>
    %53 = arith.mulf %52, %24 : vector<16x128xf32>
    %cst_19 = arith.constant 1.000000e+00 : f32
    %54 = vector.broadcast %cst_19 : f32 to vector<16x128xf32>
    %55 = arith.subf %54, %53 : vector<16x128xf32>
    %56 = arith.mulf %51, %55 : vector<16x128xf32>
    %cst_20 = arith.constant 0.373176336 : f32
    %57 = vector.broadcast %cst_20 : f32 to vector<16x128xf32>
    %58 = arith.mulf %57, %11 : vector<16x128xf32>
    %cst_21 = arith.constant 5.000000e+00 : f32
    %59 = vector.broadcast %cst_21 : f32 to vector<16x128xf32>
    %60 = arith.mulf %59, %24 : vector<16x128xf32>
    %cst_22 = arith.constant 3.000000e+00 : f32
    %61 = vector.broadcast %cst_22 : f32 to vector<16x128xf32>
    %62 = arith.subf %60, %61 : vector<16x128xf32>
    %63 = arith.mulf %58, %62 : vector<16x128xf32>
    %cst_23 = arith.constant 0.457045794 : f32
    %64 = vector.broadcast %cst_23 : f32 to vector<16x128xf32>
    %65 = arith.mulf %64, %5 : vector<16x128xf32>
    %cst_24 = arith.constant 5.000000e+00 : f32
    %66 = vector.broadcast %cst_24 : f32 to vector<16x128xf32>
    %67 = arith.mulf %66, %24 : vector<16x128xf32>
    %cst_25 = arith.constant 1.000000e+00 : f32
    %68 = vector.broadcast %cst_25 : f32 to vector<16x128xf32>
    %69 = arith.subf %68, %67 : vector<16x128xf32>
    %70 = arith.mulf %65, %69 : vector<16x128xf32>
    %cst_26 = arith.constant 1.44530571 : f32
    %71 = vector.broadcast %cst_26 : f32 to vector<16x128xf32>
    %72 = arith.mulf %71, %11 : vector<16x128xf32>
    %73 = arith.subf %22, %23 : vector<16x128xf32>
    %74 = arith.mulf %72, %73 : vector<16x128xf32>
    %cst_27 = arith.constant 0.590043604 : f32
    %75 = vector.broadcast %cst_27 : f32 to vector<16x128xf32>
    %76 = arith.mulf %75, %5 : vector<16x128xf32>
    %cst_28 = arith.constant 0.000000e+00 : f32
    %77 = vector.broadcast %cst_28 : f32 to vector<16x128xf32>
    %78 = arith.subf %77, %22 : vector<16x128xf32>
    %cst_29 = arith.constant 3.000000e+00 : f32
    %79 = vector.broadcast %cst_29 : f32 to vector<16x128xf32>
    %80 = arith.mulf %79, %23 : vector<16x128xf32>
    %81 = arith.addf %78, %80 : vector<16x128xf32>
    %82 = arith.mulf %76, %81 : vector<16x128xf32>
    %c1_30 = arith.constant 1 : index
    %83 = arith.index_cast %2 : i32 to index
    %c0_31 = arith.constant 0 : index
    %84 = vector.load %arg2[%c1_30, %83, %c0_31] : memref<16x16x128xf32, #tpu.memory_space<vmem>>, vector<1x16x128xf32>
    %85 = vector.shape_cast %84 : vector<1x16x128xf32> to vector<16x128xf32>
    %86 = vector.shape_cast %17 : vector<16x128xf32> to vector<1x16x128xf32>
    tpu.vector_store %arg2[%c1_30, %83, %c0_31], %86 {strides = array<i32>} : memref<16x16x128xf32, #tpu.memory_space<vmem>>, vector<1x16x128xf32>,
    %c2_32 = arith.constant 2 : index
    %87 = arith.index_cast %2 : i32 to index
    %c0_33 = arith.constant 0 : index
    %88 = vector.load %arg2[%c2_32, %87, %c0_33] : memref<16x16x128xf32, #tpu.memory_space<vmem>>, vector<1x16x128xf32>
    %89 = vector.shape_cast %88 : vector<1x16x128xf32> to vector<16x128xf32>
    %90 = vector.shape_cast %19 : vector<16x128xf32> to vector<1x16x128xf32>
    tpu.vector_store %arg2[%c2_32, %87, %c0_33], %90 {strides = array<i32>} : memref<16x16x128xf32, #tpu.memory_space<vmem>>, vector<1x16x128xf32>,
    %c3 = arith.constant 3 : index
    %91 = arith.index_cast %2 : i32 to index
    %c0_34 = arith.constant 0 : index
    %92 = vector.load %arg2[%c3, %91, %c0_34] : memref<16x16x128xf32, #tpu.memory_space<vmem>>, vector<1x16x128xf32>
    %93 = vector.shape_cast %92 : vector<1x16x128xf32> to vector<16x128xf32>
    %94 = vector.shape_cast %21 : vector<16x128xf32> to vector<1x16x128xf32>
    tpu.vector_store %arg2[%c3, %91, %c0_34], %94 {strides = array<i32>} : memref<16x16x128xf32, #tpu.memory_space<vmem>>, vector<1x16x128xf32>,
    %c4 = arith.constant 4 : index
    %95 = arith.index_cast %2 : i32 to index
    %c0_35 = arith.constant 0 : index
    %96 = vector.load %arg2[%c4, %95, %c0_35] : memref<16x16x128xf32, #tpu.memory_space<vmem>>, vector<1x16x128xf32>
    %97 = vector.shape_cast %96 : vector<1x16x128xf32> to vector<16x128xf32>
    %98 = vector.shape_cast %29 : vector<16x128xf32> to vector<1x16x128xf32>
    tpu.vector_store %arg2[%c4, %95, %c0_35], %98 {strides = array<i32>} : memref<16x16x128xf32, #tpu.memory_space<vmem>>, vector<1x16x128xf32>,
    %c5 = arith.constant 5 : index
    %99 = arith.index_cast %2 : i32 to index
    %c0_36 = arith.constant 0 : index
    %100 = vector.load %arg2[%c5, %99, %c0_36] : memref<16x16x128xf32, #tpu.memory_space<vmem>>, vector<1x16x128xf32>
    %101 = vector.shape_cast %100 : vector<1x16x128xf32> to vector<16x128xf32>
    %102 = vector.shape_cast %31 : vector<16x128xf32> to vector<1x16x128xf32>
    tpu.vector_store %arg2[%c5, %99, %c0_36], %102 {strides = array<i32>} : memref<16x16x128xf32, #tpu.memory_space<vmem>>, vector<1x16x128xf32>,
    %c6 = arith.constant 6 : index
    %103 = arith.index_cast %2 : i32 to index
    %c0_37 = arith.constant 0 : index
    %104 = vector.load %arg2[%c6, %103, %c0_37] : memref<16x16x128xf32, #tpu.memory_space<vmem>>, vector<1x16x128xf32>
    %105 = vector.shape_cast %104 : vector<1x16x128xf32> to vector<16x128xf32>
    %106 = vector.shape_cast %35 : vector<16x128xf32> to vector<1x16x128xf32>
    tpu.vector_store %arg2[%c6, %103, %c0_37], %106 {strides = array<i32>} : memref<16x16x128xf32, #tpu.memory_space<vmem>>, vector<1x16x128xf32>,
    %c7 = arith.constant 7 : index
    %107 = arith.index_cast %2 : i32 to index
    %c0_38 = arith.constant 0 : index
    %108 = vector.load %arg2[%c7, %107, %c0_38] : memref<16x16x128xf32, #tpu.memory_space<vmem>>, vector<1x16x128xf32>
    %109 = vector.shape_cast %108 : vector<1x16x128xf32> to vector<16x128xf32>
    %110 = vector.shape_cast %37 : vector<16x128xf32> to vector<1x16x128xf32>
    tpu.vector_store %arg2[%c7, %107, %c0_38], %110 {strides = array<i32>} : memref<16x16x128xf32, #tpu.memory_space<vmem>>, vector<1x16x128xf32>,
    %c8 = arith.constant 8 : index
    %111 = arith.index_cast %2 : i32 to index
    %c0_39 = arith.constant 0 : index
    %112 = vector.load %arg2[%c8, %111, %c0_39] : memref<16x16x128xf32, #tpu.memory_space<vmem>>, vector<1x16x128xf32>
    %113 = vector.shape_cast %112 : vector<1x16x128xf32> to vector<16x128xf32>
    %114 = vector.shape_cast %40 : vector<16x128xf32> to vector<1x16x128xf32>
    tpu.vector_store %arg2[%c8, %111, %c0_39], %114 {strides = array<i32>} : memref<16x16x128xf32, #tpu.memory_space<vmem>>, vector<1x16x128xf32>,
    %c9 = arith.constant 9 : index
    %115 = arith.index_cast %2 : i32 to index
    %c0_40 = arith.constant 0 : index
    %116 = vector.load %arg2[%c9, %115, %c0_40] : memref<16x16x128xf32, #tpu.memory_space<vmem>>, vector<1x16x128xf32>
    %117 = vector.shape_cast %116 : vector<1x16x128xf32> to vector<16x128xf32>
    %118 = vector.shape_cast %46 : vector<16x128xf32> to vector<1x16x128xf32>
    tpu.vector_store %arg2[%c9, %115, %c0_40], %118 {strides = array<i32>} : memref<16x16x128xf32, #tpu.memory_space<vmem>>, vector<1x16x128xf32>,
    %c10 = arith.constant 10 : index
    %119 = arith.index_cast %2 : i32 to index
    %c0_41 = arith.constant 0 : index
    %120 = vector.load %arg2[%c10, %119, %c0_41] : memref<16x16x128xf32, #tpu.memory_space<vmem>>, vector<1x16x128xf32>
    %121 = vector.shape_cast %120 : vector<1x16x128xf32> to vector<16x128xf32>
    %122 = vector.shape_cast %49 : vector<16x128xf32> to vector<1x16x128xf32>
    tpu.vector_store %arg2[%c10, %119, %c0_41], %122 {strides = array<i32>} : memref<16x16x128xf32, #tpu.memory_space<vmem>>, vector<1x16x128xf32>,
    %c11 = arith.constant 11 : index
    %123 = arith.index_cast %2 : i32 to index
    %c0_42 = arith.constant 0 : index
    %124 = vector.load %arg2[%c11, %123, %c0_42] : memref<16x16x128xf32, #tpu.memory_space<vmem>>, vector<1x16x128xf32>
    %125 = vector.shape_cast %124 : vector<1x16x128xf32> to vector<16x128xf32>
    %126 = vector.shape_cast %56 : vector<16x128xf32> to vector<1x16x128xf32>
    tpu.vector_store %arg2[%c11, %123, %c0_42], %126 {strides = array<i32>} : memref<16x16x128xf32, #tpu.memory_space<vmem>>, vector<1x16x128xf32>,
    %c12 = arith.constant 12 : index
    %127 = arith.index_cast %2 : i32 to index
    %c0_43 = arith.constant 0 : index
    %128 = vector.load %arg2[%c12, %127, %c0_43] : memref<16x16x128xf32, #tpu.memory_space<vmem>>, vector<1x16x128xf32>
    %129 = vector.shape_cast %128 : vector<1x16x128xf32> to vector<16x128xf32>
    %130 = vector.shape_cast %63 : vector<16x128xf32> to vector<1x16x128xf32>
    tpu.vector_store %arg2[%c12, %127, %c0_43], %130 {strides = array<i32>} : memref<16x16x128xf32, #tpu.memory_space<vmem>>, vector<1x16x128xf32>,
    %c13 = arith.constant 13 : index
    %131 = arith.index_cast %2 : i32 to index
    %c0_44 = arith.constant 0 : index
    %132 = vector.load %arg2[%c13, %131, %c0_44] : memref<16x16x128xf32, #tpu.memory_space<vmem>>, vector<1x16x128xf32>
    %133 = vector.shape_cast %132 : vector<1x16x128xf32> to vector<16x128xf32>
    %134 = vector.shape_cast %70 : vector<16x128xf32> to vector<1x16x128xf32>
    tpu.vector_store %arg2[%c13, %131, %c0_44], %134 {strides = array<i32>} : memref<16x16x128xf32, #tpu.memory_space<vmem>>, vector<1x16x128xf32>,
    %c14 = arith.constant 14 : index
    %135 = arith.index_cast %2 : i32 to index
    %c0_45 = arith.constant 0 : index
    %136 = vector.load %arg2[%c14, %135, %c0_45] : memref<16x16x128xf32, #tpu.memory_space<vmem>>, vector<1x16x128xf32>
    %137 = vector.shape_cast %136 : vector<1x16x128xf32> to vector<16x128xf32>
    %138 = vector.shape_cast %74 : vector<16x128xf32> to vector<1x16x128xf32>
    tpu.vector_store %arg2[%c14, %135, %c0_45], %138 {strides = array<i32>} : memref<16x16x128xf32, #tpu.memory_space<vmem>>, vector<1x16x128xf32>,
    %c15 = arith.constant 15 : index
    %139 = arith.index_cast %2 : i32 to index
    %c0_46 = arith.constant 0 : index
    %140 = vector.load %arg2[%c15, %139, %c0_46] : memref<16x16x128xf32, #tpu.memory_space<vmem>>, vector<1x16x128xf32>
    %141 = vector.shape_cast %140 : vector<1x16x128xf32> to vector<16x128xf32>
    %142 = vector.shape_cast %82 : vector<16x128xf32> to vector<1x16x128xf32>
    tpu.vector_store %arg2[%c15, %139, %c0_46], %142 {strides = array<i32>} : memref<16x16x128xf32, #tpu.memory_space<vmem>>, vector<1x16x128xf32>,
    %c1_i32 = arith.constant 1 : i32
    return
  }
  func.func @transform_0(%arg0: i32) -> (i32, i32, i32) {
    %c0_i32 = arith.constant 0 : i32
    %c0_i32_0 = arith.constant 0 : i32
    %c0_i32_1 = arith.constant 0 : i32
    return %c0_i32, %arg0, %c0_i32_0 : i32, i32, i32
  }
  func.func @transform_1(%arg0: i32) -> (i32, i32, i32) {
    %c0_i32 = arith.constant 0 : i32
    %c0_i32_0 = arith.constant 0 : i32
    %c0_i32_1 = arith.constant 0 : i32
    return %c0_i32, %arg0, %c0_i32_0 : i32, i32, i32
  }
}

</mosaic_0001>

<llo_original>
// kernel: sh_encode_from_planar.1
$region0: #{sh_encode_from_planar.1}
  #allocation0 [shape = 'u32[]', space=smem, size = 0x4, offset = 0x4, fixed_abs, tag = 'smem constant byte address 0x4 - core index']
  #allocation1 [shape = 'u32[72,128]{1,0:T(1,128)}', space=vmem, size = 0x9000, scoped, tag = 'internal scratch']
  %s0 = inlined_call_operand.vmem [shape: f32[3,32,128], index: 0, kind: input, shape index: {}]
  %s1 = inlined_call_operand.vmem [shape: f32[16,32,128], index: 1, kind: output, shape index: {}]
  %s2 = sld [smem:[#allocation0]]
  $region109: #{sh_encode_from_planar.1} parent=0
    _
  %s4 = ssub.s32 1, %s2
  %s5 = scalar_select 0, %s4, %s2
  $region1: #{sh_encode_from_planar.1} parent=0
    #allocation2 [shape = 'u8[49152]{0}', space=vmem, size = 0xc000, scoped, tag = 'input window, operand 0']
    #allocation3 [shape = 'u8[262144]{0}', space=vmem, size = 0x40000, scoped, tag = 'output window, operand 0']
    loop: start=0, step=1, limit=4
    $region2: #{sh_encode_from_planar.1} parent=1 // loop_pre_header
      _
    $region3: #{sh_encode_from_planar.1} parent=1 // loop_header
      %s7 = sphi 0, %s11
      %p8 = scmp.ge.s32.totalorder %s7, 4
      %s17 = sphi 0, %s19
      %s20 = sphi 0, %s17
      %s21 = sphi 0, %s20
      %s37 = sphi 0, %s21
      %s43 = sphi 0, %s45
      %s46 = sphi 0, %s43
      %s47 = sphi 0, %s46
      %s63 = sphi 0, %s47
    $region4: #{sh_encode_from_planar.1} parent=1 // loop_header_branch
      %10 = sbr.rel (%p8) target = $region8
    $region5: #{sh_encode_from_planar.1} parent=1 // loop_body
      %s12 = ssub.s32 %s7, 1
      %s13 = ssub.s32 %s7, 2
      %s14 = sadd.s32 %s7, 1
      %s15 = ssub.s32 %s7, %s14
      %p16 = scmp.eq.s32.totalorder %s15, 0
      %s18 = sadd.s32 %s17, 1
      %s19 = scalar_select %p16, %s17, %s18
      %p22 = pneg %p16
      %p23 = scmp.eq.s32.totalorder %s7, 1
      %p24 = por %p22, %p23
      %p25 = scmp.ne.s32.totalorder %s17, %s20
      %p26 = scmp.eq.s32.totalorder %s7, 0
      %p27 = por %p25, %p26
      %p28 = scmp.ne.s32.totalorder %s17, %s20
      %p29 = scmp.eq.s32.totalorder %s12, 1
      %p30 = por %p28, %p29
      %p31 = scmp.ne.s32.totalorder %s20, %s21
      %p32 = scmp.eq.s32.totalorder %s12, 0
      %p33 = por %p31, %p32
      %p34 = scmp.ne.s32.totalorder %s20, %s21
      %p35 = scmp.eq.s32.totalorder %s13, 1
      %p36 = por %p34, %p35
      %p38 = scmp.ne.s32.totalorder %s21, %s37
      %p39 = scmp.eq.s32.totalorder %s13, 0
      %p40 = por %p38, %p39
      %s41 = ssub.s32 %s7, %s14
      %p42 = scmp.eq.s32.totalorder %s41, 0
      %s44 = sadd.s32 %s43, 1
      %s45 = scalar_select %p42, %s43, %s44
      %p48 = pneg %p42
      %p49 = scmp.eq.s32.totalorder %s7, 1
      %p50 = por %p48, %p49
      %p51 = scmp.ne.s32.totalorder %s43, %s46
      %p52 = scmp.eq.s32.totalorder %s7, 0
      %p53 = por %p51, %p52
      %p54 = scmp.ne.s32.totalorder %s43, %s46
      %p55 = scmp.eq.s32.totalorder %s12, 1
      %p56 = por %p54, %p55
      %p57 = scmp.ne.s32.totalorder %s46, %s47
      %p58 = scmp.eq.s32.totalorder %s12, 0
      %p59 = por %p57, %p58
      %p60 = scmp.ne.s32.totalorder %s46, %s47
      %p61 = scmp.eq.s32.totalorder %s13, 1
      %p62 = por %p60, %p61
      %p64 = scmp.ne.s32.totalorder %s47, %s63
      %p65 = scmp.eq.s32.totalorder %s13, 0
      %p66 = por %p64, %p65
      %p67 = scmp.le.s32.totalorder 1, %s7
      %p68 = scmp.lt.s32.totalorder %s7, 3
      %p69 = pnand %p67, %p68
      %p70 = pneg %p69
      // Predicated region
      $region9: #{sh_encode_from_planar.1} parent=5 // pred_check
        _
      $region10: #{sh_encode_from_planar.1} parent=5 // pred_check_branch
        %72 = sbr.rel (%p69) target = $region12
      $region11: #{sh_encode_from_planar.1} parent=5 // pred_region
        %s73 = ssub.s32 %s7, 1
      $region12: #{sh_encode_from_planar.1} parent=5 // pred_fallthru
        _
      %p74 = scmp.lt.s32.totalorder %s7, 2
      // Predicated region
      $region13: #{sh_encode_from_planar.1} parent=5 // pred_check
        %p75 = pneg %p74
      $region14: #{sh_encode_from_planar.1} parent=5 // pred_check_branch
        %77 = sbr.rel (%p75) target = $region16
      $region15: #{sh_encode_from_planar.1} parent=5 // pred_region
        // Predicated region
        $region17: #{sh_encode_from_planar.1} parent=15 // pred_check
          %p78 = pneg %p27
        $region18: #{sh_encode_from_planar.1} parent=15 // pred_check_branch
          %80 = sbr.rel (%p78) target = $region20
        $region19: #{sh_encode_from_planar.1} parent=15 // pred_region
          %s81 = sand.u32 %s17, 1
          %s82 = sand.u32 %s17, 1
          %s83 = smul.addr %s82, 48
          %s84 = scalar_lea.vmem [#allocation2], %s83
          %s85 = smul.u32 2, %s7
          %s86 = smul.addr %s85, 8
          %s87 = scalar_lea.vmem %s0, %s86
          // Predicated region
          $region21: #{sh_encode_from_planar.1} parent=19 // pred_check
            _
          $region22: #{sh_encode_from_planar.1} parent=19 // pred_check_branch
            %89 = sbr.rel (0) target = $region24
          $region23: #{sh_encode_from_planar.1} parent=19 // pred_region
            // Predicated region
            $region25: #{sh_encode_from_planar.1} parent=23 // pred_check
              _
            $region26: #{sh_encode_from_planar.1} parent=23 // pred_check_branch
              %91 = sbr.rel (0) target = $region28
            $region27: #{sh_encode_from_planar.1} parent=23 // pred_region
              // Predicated region
              $region40: #{sh_encode_from_planar.1} parent=27 // pred_check
                _
              $region41: #{sh_encode_from_planar.1} parent=27 // pred_check_branch
                %117 = sbr.rel (0) target = $region43
              $region42: #{sh_encode_from_planar.1} parent=27 // pred_region
                loop: start=0, step=1, limit=1
                $region44: #{sh_encode_from_planar.1} parent=42 // loop_pre_header
                  _
                $region45: #{sh_encode_from_planar.1} parent=42 // loop_header
                  %s119 = sphi 0, %s123
                  %p120 = scmp.ge.s32.totalorder %s119, 1
                  %s124 = sphi %s87, %s87
                  %s125 = sphi %s84, %s84
                $region46: #{sh_encode_from_planar.1} parent=42 // loop_header_branch
                  %122 = sbr.rel (%p120) target = $region50
                $region47: #{sh_encode_from_planar.1} parent=42 // loop_body
                  %v126 = vld [vmem:[%s124] sm:$0xff]
                  %127 = vst [vmem:[%s125] sm:$0xff] %v126
                  %v128 = vld [vmem:[%s124 + $0x8] sm:$0xff]
                  %129 = vst [vmem:[%s125 + $0x8] sm:$0xff] %v128
                  %v130 = vld [vmem:[%s124 + $0x20] sm:$0xff]
                  %131 = vst [vmem:[%s125 + $0x10] sm:$0xff] %v130
                  %v132 = vld [vmem:[%s124 + $0x28] sm:$0xff]
                  %133 = vst [vmem:[%s125 + $0x18] sm:$0xff] %v132
                  %v134 = vld [vmem:[%s124 + $0x40] sm:$0xff]
                  %135 = vst [vmem:[%s125 + $0x20] sm:$0xff] %v134
                  %v136 = vld [vmem:[%s124 + $0x48] sm:$0xff]
                  %137 = vst [vmem:[%s125 + $0x28] sm:$0xff] %v136
                $region48: #{sh_encode_from_planar.1} parent=42 // loop_footer
                  %s123 = sadd.s32 1, %s119
                $region49: #{sh_encode_from_planar.1} parent=42 // loop_footer_branch
                  %118 = sbr.rel target = $region45
                $region50: #{sh_encode_from_planar.1} parent=42 // loop_exit
                  _
              $region43: #{sh_encode_from_planar.1} parent=27 // pred_fallthru
                _
              // Predicated region
              $region51: #{sh_encode_from_planar.1} parent=27 // pred_check
                _
              $region52: #{sh_encode_from_planar.1} parent=27 // pred_check_branch
                %139 = sbr.rel target = $region54
              $region53: #{sh_encode_from_planar.1} parent=27 // pred_region
                _
              $region54: #{sh_encode_from_planar.1} parent=27 // pred_fallthru
                _
            $region28: #{sh_encode_from_planar.1} parent=23 // pred_fallthru
              _
            // Predicated region
            $region29: #{sh_encode_from_planar.1} parent=23 // pred_check
              _
            $region30: #{sh_encode_from_planar.1} parent=23 // pred_check_branch
              %93 = sbr.rel target = $region32
            $region31: #{sh_encode_from_planar.1} parent=23 // pred_region
              %s95 = ssub.s32 256, 1
              loop: start=0, step=1, limit=1
              $region33: #{sh_encode_from_planar.1} parent=31 // loop_pre_header
                _
              $region34: #{sh_encode_from_planar.1} parent=31 // loop_header
                %s97 = sphi 0, %s101
                %p98 = scmp.ge.s32.totalorder %s97, 1
                %s102 = sphi %s87, %s87
                %s103 = sphi %s84, %s84
              $region35: #{sh_encode_from_planar.1} parent=31 // loop_header_branch
                %100 = sbr.rel (%p98) target = $region39
              $region36: #{sh_encode_from_planar.1} parent=31 // loop_body
                %v104 = vld [vmem:[%s102] sm:%s95]
                %105 = vst [vmem:[%s103] sm:%s95] %v104
                %v106 = vld [vmem:[%s102 + $0x8] sm:%s95]
                %107 = vst [vmem:[%s103 + $0x8] sm:%s95] %v106
                %v108 = vld [vmem:[%s102 + $0x20] sm:%s95]
                %109 = vst [vmem:[%s103 + $0x10] sm:%s95] %v108
                %v110 = vld [vmem:[%s102 + $0x28] sm:%s95]
                %111 = vst [vmem:[%s103 + $0x18] sm:%s95] %v110
                %v112 = vld [vmem:[%s102 + $0x40] sm:%s95]
                %113 = vst [vmem:[%s103 + $0x20] sm:%s95] %v112
                %v114 = vld [vmem:[%s102 + $0x48] sm:%s95]
                %115 = vst [vmem:[%s103 + $0x28] sm:%s95] %v114
              $region37: #{sh_encode_from_planar.1} parent=31 // loop_footer
                %s101 = sadd.s32 1, %s97
              $region38: #{sh_encode_from_planar.1} parent=31 // loop_footer_branch
                %96 = sbr.rel target = $region34
              $region39: #{sh_encode_from_planar.1} parent=31 // loop_exit
                _
            $region32: #{sh_encode_from_planar.1} parent=23 // pred_fallthru
              _
          $region24: #{sh_encode_from_planar.1} parent=19 // pred_fallthru
            _
          %140 = vnop
        $region20: #{sh_encode_from_planar.1} parent=15 // pred_fallthru
          _
      $region16: #{sh_encode_from_planar.1} parent=5 // pred_fallthru
        _
      %p141 = scmp.le.s32.totalorder 1, %s7
      %p142 = scmp.lt.s32.totalorder %s7, 3
      %p143 = pnand %p141, %p142
      %p144 = pneg %p143
      // Predicated region
      $region55: #{sh_encode_from_planar.1} parent=5 // pred_check
        _
      $region56: #{sh_encode_from_planar.1} parent=5 // pred_check_branch
        %146 = sbr.rel (%p143) target = $region58
      $region57: #{sh_encode_from_planar.1} parent=5 // pred_region
        %s147 = ssub.s32 %s7, 1
        %s148 = sand.u32 %s20, 1
        %s149 = sand.u32 %s20, 1
        %s150 = smul.addr %s149, 48
        %s151 = scalar_lea.vmem [#allocation2], %s150
        // Predicated region
        $region59: #{sh_encode_from_planar.1} parent=57 // pred_check
          %p152 = pneg %p33
        $region60: #{sh_encode_from_planar.1} parent=57 // pred_check_branch
          %154 = sbr.rel (%p152) target = $region62
        $region61: #{sh_encode_from_planar.1} parent=57 // pred_region
          _
        $region62: #{sh_encode_from_planar.1} parent=57 // pred_fallthru
          _
        %s155 = sand.u32 %s20, 1
        %s156 = sand.u32 %s20, 1
        %s157 = smul.addr %s156, 48
        %s158 = scalar_lea.vmem [#allocation2], %s157
        %p159 = pneg %p33
        %p160 = pneg %p30
        %p161 = pneg %p59
        %p162 = pneg %p56
        %s163 = sand.u32 %s46, 1
        %s164 = sand.u32 %s46, 1
        %s165 = smul.addr %s164, 256
        %s166 = scalar_lea.vmem [#allocation3], %s165
        %s167 = smul.u32 2, %s12
        %s168 = smul.u32 2, %s12
        %v169 = vld [vmem:[%s151] sm:$0xff]
        %v170 = vld [vmem:[%s151 + $0x8] sm:$0xff]
        %s171 = sadd.s32 0, 16
        %s172 = scalar_lea.vmem %s151, %s171 [#allocation2]
        %v173 = vld [vmem:[%s172] sm:$0xff]
        %v174 = vld [vmem:[%s172 + $0x8] sm:$0xff]
        %s175 = sadd.s32 0, 32
        %s176 = scalar_lea.vmem %s151, %s175 [#allocation2]
        %v177 = vld [vmem:[%s176] sm:$0xff]
        %v178 = vld [vmem:[%s176 + $0x8] sm:$0xff]
        %179 = vst [vmem:[%s166] sm:$0xff] 0.2820948
        %180 = vst [vmem:[%s166 + $0x8] sm:$0xff] 0.2820948
        %v181 = vmul.f32 %v173, -0.48860252
        %v182 = vmul.f32 %v174, -0.48860252
        %v183 = vmul.f32 %v177, 0.48860252
        %v184 = vmul.f32 %v178, 0.48860252
        %v185 = vmul.f32 %v169, -0.48860252
        %v186 = vmul.f32 %v170, -0.48860252
        %v187 = vmul.f32 %v169, %v169
        %v188 = vmul.f32 %v170, %v170
        %v189 = vmul.f32 %v173, %v173
        %v190 = vmul.f32 %v174, %v174
        %v191 = vmul.f32 %v177, %v177
        %v192 = vmul.f32 %v178, %v178
        %v193 = vmul.f32 %v169, %v173
        %v194 = vmul.f32 %v170, %v174
        %v195 = vmul.f32 %v173, %v177
        %v196 = vmul.f32 %v174, %v178
        %v197 = vmul.f32 %v169, %v177
        %v198 = vmul.f32 %v170, %v178
        %v199 = vmul.f32 %v193, 1.0925485
        %v200 = vmul.f32 %v194, 1.0925485
        %v201 = vmul.f32 %v195, -1.0925485
        %v202 = vmul.f32 %v196, -1.0925485
        %v203 = vmul.f32 %v191, 0.9461747
        %v204 = vmul.f32 %v192, 0.9461747
        %v205 = vsub.f32 %v203, 0.31539157
        %v206 = vsub.f32 %v204, 0.31539157
        %v207 = vmul.f32 %v197, -1.0925485
        %v208 = vmul.f32 %v198, -1.0925485
        %v209 = vsub.f32 %v187, %v189
        %v210 = vsub.f32 %v188, %v190
        %v211 = vmul.f32 %v209, 0.54627424
        %v212 = vmul.f32 %v210, 0.54627424
        %v213 = vmul.f32 %v173, 0.5900436
        %v214 = vmul.f32 %v174, 0.5900436
        %v215 = vmul.f32 %v187, -3.0
        %v216 = vmul.f32 %v188, -3.0
        %v217 = vadd.f32 %v215, %v189
        %v218 = vadd.f32 %v216, %v190
        %v219 = vmul.f32 %v213, %v217
        %v220 = vmul.f32 %v214, %v218
        %v221 = vmul.f32 %v193, 2.8906114
        %v222 = vmul.f32 %v194, 2.8906114
        %v223 = vmul.f32 %v221, %v177
        %v224 = vmul.f32 %v222, %v178
        %v225 = vmul.f32 %v173, 0.4570458
        %v226 = vmul.f32 %v174, 0.4570458
        %v227 = vmul.f32 %v191, 5.0
        %v228 = vmul.f32 %v192, 5.0
        %v229 = vsub.f32 1.0, %v227
        %v230 = vsub.f32 1.0, %v228
        %v231 = vmul.f32 %v225, %v229
        %v232 = vmul.f32 %v226, %v230
        %v233 = vmul.f32 %v177, 0.37317634
        %v234 = vmul.f32 %v178, 0.37317634
        %v235 = vsub.f32 %v227, 3.0
        %v236 = vsub.f32 %v228, 3.0
        %v237 = vmul.f32 %v233, %v235
        %v238 = vmul.f32 %v234, %v236
        %v239 = vmul.f32 %v169, 0.4570458
        %v240 = vmul.f32 %v170, 0.4570458
        %v241 = vmul.f32 %v239, %v229
        %v242 = vmul.f32 %v240, %v230
        %v243 = vmul.f32 %v177, 1.4453057
        %v244 = vmul.f32 %v178, 1.4453057
        %v245 = vmul.f32 %v243, %v209
        %v246 = vmul.f32 %v244, %v210
        %v247 = vmul.f32 %v169, 0.5900436
        %v248 = vmul.f32 %v170, 0.5900436
        %v249 = vsub.f32 0.0, %v187
        %v250 = vsub.f32 0.0, %v188
        %v251 = vmul.f32 %v189, 3.0
        %v252 = vmul.f32 %v190, 3.0
        %v253 = vadd.f32 %v249, %v251
        %v254 = vadd.f32 %v250, %v252
        %v255 = vmul.f32 %v247, %v253
        %v256 = vmul.f32 %v248, %v254
        %s257 = scalar_lea.vmem %s166, %s171 [#allocation3]
        %258 = vst [vmem:[%s257] sm:$0xff] %v181
        %259 = vst [vmem:[%s257 + $0x8] sm:$0xff] %v182
        %s260 = scalar_lea.vmem %s166, %s175 [#allocation3]
        %261 = vst [vmem:[%s260] sm:$0xff] %v183
        %262 = vst [vmem:[%s260 + $0x8] sm:$0xff] %v184
        %s263 = sadd.s32 0, 48
        %s264 = scalar_lea.vmem %s166, %s263 [#allocation3]
        %265 = vst [vmem:[%s264] sm:$0xff] %v185
        %266 = vst [vmem:[%s264 + $0x8] sm:$0xff] %v186
        %s267 = sadd.s32 0, 64
        %s268 = scalar_lea.vmem %s166, %s267 [#allocation3]
        %269 = vst [vmem:[%s268] sm:$0xff] %v199
        %270 = vst [vmem:[%s268 + $0x8] sm:$0xff] %v200
        %s271 = sadd.s32 0, 80
        %s272 = scalar_lea.vmem %s166, %s271 [#allocation3]
        %273 = vst [vmem:[%s272] sm:$0xff] %v201
        %274 = vst [vmem:[%s272 + $0x8] sm:$0xff] %v202
        %s275 = sadd.s32 0, 96
        %s276 = scalar_lea.vmem %s166, %s275 [#allocation3]
        %277 = vst [vmem:[%s276] sm:$0xff] %v205
        %278 = vst [vmem:[%s276 + $0x8] sm:$0xff] %v206
        %s279 = sadd.s32 0, 112
        %s280 = scalar_lea.vmem %s166, %s279 [#allocation3]
        %281 = vst [vmem:[%s280] sm:$0xff] %v207
        %282 = vst [vmem:[%s280 + $0x8] sm:$0xff] %v208
        %s283 = sadd.s32 0, 128
        %s284 = scalar_lea.vmem %s166, %s283 [#allocation3]
        %285 = vst [vmem:[%s284] sm:$0xff] %v211
        %286 = vst [vmem:[%s284 + $0x8] sm:$0xff] %v212
        %s287 = sadd.s32 0, 144
        %s288 = scalar_lea.vmem %s166, %s287 [#allocation3]
        %289 = vst [vmem:[%s288] sm:$0xff] %v219
        %290 = vst [vmem:[%s288 + $0x8] sm:$0xff] %v220
        %s291 = sadd.s32 0, 160
        %s292 = scalar_lea.vmem %s166, %s291 [#allocation3]
        %293 = vst [vmem:[%s292] sm:$0xff] %v223
        %294 = vst [vmem:[%s292 + $0x8] sm:$0xff] %v224
        %s295 = sadd.s32 0, 176
        %s296 = scalar_lea.vmem %s166, %s295 [#allocation3]
        %297 = vst [vmem:[%s296] sm:$0xff] %v231
        %298 = vst [vmem:[%s296 + $0x8] sm:$0xff] %v232
        %s299 = sadd.s32 0, 192
        %s300 = scalar_lea.vmem %s166, %s299 [#allocation3]
        %301 = vst [vmem:[%s300] sm:$0xff] %v237
        %302 = vst [vmem:[%s300 + $0x8] sm:$0xff] %v238
        %s303 = sadd.s32 0, 208
        %s304 = scalar_lea.vmem %s166, %s303 [#allocation3]
        %305 = vst [vmem:[%s304] sm:$0xff] %v241
        %306 = vst [vmem:[%s304 + $0x8] sm:$0xff] %v242
        %s307 = sadd.s32 0, 224
        %s308 = scalar_lea.vmem %s166, %s307 [#allocation3]
        %309 = vst [vmem:[%s308] sm:$0xff] %v245
        %310 = vst [vmem:[%s308 + $0x8] sm:$0xff] %v246
        %s311 = sadd.s32 0, 240
        %s312 = scalar_lea.vmem %s166, %s311 [#allocation3]
        %313 = vst [vmem:[%s312] sm:$0xff] %v255
        %314 = vst [vmem:[%s312 + $0x8] sm:$0xff] %v256
        %s315 = sand.u32 %s46, 1
        %s316 = sand.u32 %s46, 1
        %s317 = smul.addr %s316, 256
        %s318 = scalar_lea.vmem [#allocation3], %s317
        // Predicated region
        $region63: #{sh_encode_from_planar.1} parent=57 // pred_check
          %p319 = pneg %p56
        $region64: #{sh_encode_from_planar.1} parent=57 // pred_check_branch
          %321 = sbr.rel (%p319) target = $region66
        $region65: #{sh_encode_from_planar.1} parent=57 // pred_region
          %s322 = smul.u32 2, %s12
          %s323 = smul.addr %s322, 8
          %s324 = scalar_lea.vmem %s1, %s323
          // Predicated region
          $region67: #{sh_encode_from_planar.1} parent=65 // pred_check
            _
          $region68: #{sh_encode_from_planar.1} parent=65 // pred_check_branch
            %326 = sbr.rel (0) target = $region70
          $region69: #{sh_encode_from_planar.1} parent=65 // pred_region
            // Predicated region
            $region71: #{sh_encode_from_planar.1} parent=69 // pred_check
              _
            $region72: #{sh_encode_from_planar.1} parent=69 // pred_check_branch
              %328 = sbr.rel (0) target = $region74
            $region73: #{sh_encode_from_planar.1} parent=69 // pred_region
              // Predicated region
              $region86: #{sh_encode_from_planar.1} parent=73 // pred_check
                _
              $region87: #{sh_encode_from_planar.1} parent=73 // pred_check_branch
                %406 = sbr.rel (0) target = $region89
              $region88: #{sh_encode_from_planar.1} parent=73 // pred_region
                loop: start=0, step=1, limit=1
                $region90: #{sh_encode_from_planar.1} parent=88 // loop_pre_header
                  _
                $region91: #{sh_encode_from_planar.1} parent=88 // loop_header
                  %s408 = sphi 0, %s412
                  %p409 = scmp.ge.s32.totalorder %s408, 1
                  %s413 = sphi %s318, %s318
                  %s414 = sphi %s324, %s324
                $region92: #{sh_encode_from_planar.1} parent=88 // loop_header_branch
                  %411 = sbr.rel (%p409) target = $region96
                $region93: #{sh_encode_from_planar.1} parent=88 // loop_body
                  %v415 = vld [vmem:[%s413] sm:$0xff]
                  %416 = vst [vmem:[%s414] sm:$0xff] %v415
                  %v417 = vld [vmem:[%s413 + $0x8] sm:$0xff]
                  %418 = vst [vmem:[%s414 + $0x8] sm:$0xff] %v417
                  %v419 = vld [vmem:[%s413 + $0x10] sm:$0xff]
                  %420 = vst [vmem:[%s414 + $0x20] sm:$0xff] %v419
                  %v421 = vld [vmem:[%s413 + $0x18] sm:$0xff]
                  %422 = vst [vmem:[%s414 + $0x28] sm:$0xff] %v421
                  %v423 = vld [vmem:[%s413 + $0x20] sm:$0xff]
                  %424 = vst [vmem:[%s414 + $0x40] sm:$0xff] %v423
                  %v425 = vld [vmem:[%s413 + $0x28] sm:$0xff]
                  %426 = vst [vmem:[%s414 + $0x48] sm:$0xff] %v425
                  %v427 = vld [vmem:[%s413 + $0x30] sm:$0xff]
                  %428 = vst [vmem:[%s414 + $0x60] sm:$0xff] %v427
                  %v429 = vld [vmem:[%s413 + $0x38] sm:$0xff]
                  %430 = vst [vmem:[%s414 + $0x68] sm:$0xff] %v429
                  %v431 = vld [vmem:[%s413 + $0x40] sm:$0xff]
                  %432 = vst [vmem:[%s414 + $0x80] sm:$0xff] %v431
                  %v433 = vld [vmem:[%s413 + $0x48] sm:$0xff]
                  %434 = vst [vmem:[%s414 + $0x88] sm:$0xff] %v433
                  %v435 = vld [vmem:[%s413 + $0x50] sm:$0xff]
                  %436 = vst [vmem:[%s414 + $0xa0] sm:$0xff] %v435
                  %v437 = vld [vmem:[%s413 + $0x58] sm:$0xff]
                  %438 = vst [vmem:[%s414 + $0xa8] sm:$0xff] %v437
                  %v439 = vld [vmem:[%s413 + $0x60] sm:$0xff]
                  %440 = vst [vmem:[%s414 + $0xc0] sm:$0xff] %v439
                  %v441 = vld [vmem:[%s413 + $0x68] sm:$0xff]
                  %442 = vst [vmem:[%s414 + $0xc8] sm:$0xff] %v441
                  %v443 = vld [vmem:[%s413 + $0x70] sm:$0xff]
                  %444 = vst [vmem:[%s414 + $0xe0] sm:$0xff] %v443
                  %v445 = vld [vmem:[%s413 + $0x78] sm:$0xff]
                  %446 = vst [vmem:[%s414 + $0xe8] sm:$0xff] %v445
                  %v447 = vld [vmem:[%s413 + $0x80] sm:$0xff]
                  %448 = vst [vmem:[%s414 + $0x100] sm:$0xff] %v447
                  %v449 = vld [vmem:[%s413 + $0x88] sm:$0xff]
                  %450 = vst [vmem:[%s414 + $0x108] sm:$0xff] %v449
                  %v451 = vld [vmem:[%s413 + $0x90] sm:$0xff]
                  %452 = vst [vmem:[%s414 + $0x120] sm:$0xff] %v451
                  %v453 = vld [vmem:[%s413 + $0x98] sm:$0xff]
                  %454 = vst [vmem:[%s414 + $0x128] sm:$0xff] %v453
                  %v455 = vld [vmem:[%s413 + $0xa0] sm:$0xff]
                  %456 = vst [vmem:[%s414 + $0x140] sm:$0xff] %v455
                  %v457 = vld [vmem:[%s413 + $0xa8] sm:$0xff]
                  %458 = vst [vmem:[%s414 + $0x148] sm:$0xff] %v457
                  %v459 = vld [vmem:[%s413 + $0xb0] sm:$0xff]
                  %460 = vst [vmem:[%s414 + $0x160] sm:$0xff] %v459
                  %v461 = vld [vmem:[%s413 + $0xb8] sm:$0xff]
                  %462 = vst [vmem:[%s414 + $0x168] sm:$0xff] %v461
                  %v463 = vld [vmem:[%s413 + $0xc0] sm:$0xff]
                  %464 = vst [vmem:[%s414 + $0x180] sm:$0xff] %v463
                  %v465 = vld [vmem:[%s413 + $0xc8] sm:$0xff]
                  %466 = vst [vmem:[%s414 + $0x188] sm:$0xff] %v465
                  %v467 = vld [vmem:[%s413 + $0xd0] sm:$0xff]
                  %468 = vst [vmem:[%s414 + $0x1a0] sm:$0xff] %v467
                  %v469 = vld [vmem:[%s413 + $0xd8] sm:$0xff]
                  %470 = vst [vmem:[%s414 + $0x1a8] sm:$0xff] %v469
                  %v471 = vld [vmem:[%s413 + $0xe0] sm:$0xff]
                  %472 = vst [vmem:[%s414 + $0x1c0] sm:$0xff] %v471
                  %v473 = vld [vmem:[%s413 + $0xe8] sm:$0xff]
                  %474 = vst [vmem:[%s414 + $0x1c8] sm:$0xff] %v473
                  %v475 = vld [vmem:[%s413 + $0xf0] sm:$0xff]
                  %476 = vst [vmem:[%s414 + $0x1e0] sm:$0xff] %v475
                  %v477 = vld [vmem:[%s413 + $0xf8] sm:$0xff]
                  %478 = vst [vmem:[%s414 + $0x1e8] sm:$0xff] %v477
                $region94: #{sh_encode_from_planar.1} parent=88 // loop_footer
                  %s412 = sadd.s32 1, %s408
                $region95: #{sh_encode_from_planar.1} parent=88 // loop_footer_branch
                  %407 = sbr.rel target = $region91
                $region96: #{sh_encode_from_planar.1} parent=88 // loop_exit
                  _
              $region89: #{sh_encode_from_planar.1} parent=73 // pred_fallthru
                _
              // Predicated region
              $region97: #{sh_encode_from_planar.1} parent=73 // pred_check
                _
              $region98: #{sh_encode_from_planar.1} parent=73 // pred_check_branch
                %480 = sbr.rel target = $region100
              $region99: #{sh_encode_from_planar.1} parent=73 // pred_region
                _
              $region100: #{sh_encode_from_planar.1} parent=73 // pred_fallthru
                _
            $region74: #{sh_encode_from_planar.1} parent=69 // pred_fallthru
              _
            // Predicated region
            $region75: #{sh_encode_from_planar.1} parent=69 // pred_check
              _
            $region76: #{sh_encode_from_planar.1} parent=69 // pred_check_branch
              %330 = sbr.rel target = $region78
            $region77: #{sh_encode_from_planar.1} parent=69 // pred_region
              %s332 = ssub.s32 256, 1
              loop: start=0, step=1, limit=1
              $region79: #{sh_encode_from_planar.1} parent=77 // loop_pre_header
                _
              $region80: #{sh_encode_from_planar.1} parent=77 // loop_header
                %s334 = sphi 0, %s338
                %p335 = scmp.ge.s32.totalorder %s334, 1
                %s339 = sphi %s318, %s318
                %s340 = sphi %s324, %s324
              $region81: #{sh_encode_from_planar.1} parent=77 // loop_header_branch
                %337 = sbr.rel (%p335) target = $region85
              $region82: #{sh_encode_from_planar.1} parent=77 // loop_body
                %v341 = vld [vmem:[%s339] sm:%s332]
                %342 = vst [vmem:[%s340] sm:%s332] %v341
                %v343 = vld [vmem:[%s339 + $0x8] sm:%s332]
                %344 = vst [vmem:[%s340 + $0x8] sm:%s332] %v343
                %v345 = vld [vmem:[%s339 + $0x10] sm:%s332]
                %346 = vst [vmem:[%s340 + $0x20] sm:%s332] %v345
                %v347 = vld [vmem:[%s339 + $0x18] sm:%s332]
                %348 = vst [vmem:[%s340 + $0x28] sm:%s332] %v347
                %v349 = vld [vmem:[%s339 + $0x20] sm:%s332]
                %350 = vst [vmem:[%s340 + $0x40] sm:%s332] %v349
                %v351 = vld [vmem:[%s339 + $0x28] sm:%s332]
                %352 = vst [vmem:[%s340 + $0x48] sm:%s332] %v351
                %v353 = vld [vmem:[%s339 + $0x30] sm:%s332]
                %354 = vst [vmem:[%s340 + $0x60] sm:%s332] %v353
                %v355 = vld [vmem:[%s339 + $0x38] sm:%s332]
                %356 = vst [vmem:[%s340 + $0x68] sm:%s332] %v355
                %v357 = vld [vmem:[%s339 + $0x40] sm:%s332]
                %358 = vst [vmem:[%s340 + $0x80] sm:%s332] %v357
                %v359 = vld [vmem:[%s339 + $0x48] sm:%s332]
                %360 = vst [vmem:[%s340 + $0x88] sm:%s332] %v359
                %v361 = vld [vmem:[%s339 + $0x50] sm:%s332]
                %362 = vst [vmem:[%s340 + $0xa0] sm:%s332] %v361
                %v363 = vld [vmem:[%s339 + $0x58] sm:%s332]
                %364 = vst [vmem:[%s340 + $0xa8] sm:%s332] %v363
                %v365 = vld [vmem:[%s339 + $0x60] sm:%s332]
                %366 = vst [vmem:[%s340 + $0xc0] sm:%s332] %v365
                %v367 = vld [vmem:[%s339 + $0x68] sm:%s332]
                %368 = vst [vmem:[%s340 + $0xc8] sm:%s332] %v367
                %v369 = vld [vmem:[%s339 + $0x70] sm:%s332]
                %370 = vst [vmem:[%s340 + $0xe0] sm:%s332] %v369
                %v371 = vld [vmem:[%s339 + $0x78] sm:%s332]
                %372 = vst [vmem:[%s340 + $0xe8] sm:%s332] %v371
                %v373 = vld [vmem:[%s339 + $0x80] sm:%s332]
                %374 = vst [vmem:[%s340 + $0x100] sm:%s332] %v373
                %v375 = vld [vmem:[%s339 + $0x88] sm:%s332]
                %376 = vst [vmem:[%s340 + $0x108] sm:%s332] %v375
                %v377 = vld [vmem:[%s339 + $0x90] sm:%s332]
                %378 = vst [vmem:[%s340 + $0x120] sm:%s332] %v377
                %v379 = vld [vmem:[%s339 + $0x98] sm:%s332]
                %380 = vst [vmem:[%s340 + $0x128] sm:%s332] %v379
                %v381 = vld [vmem:[%s339 + $0xa0] sm:%s332]
                %382 = vst [vmem:[%s340 + $0x140] sm:%s332] %v381
                %v383 = vld [vmem:[%s339 + $0xa8] sm:%s332]
                %384 = vst [vmem:[%s340 + $0x148] sm:%s332] %v383
                %v385 = vld [vmem:[%s339 + $0xb0] sm:%s332]
                %386 = vst [vmem:[%s340 + $0x160] sm:%s332] %v385
                %v387 = vld [vmem:[%s339 + $0xb8] sm:%s332]
                %388 = vst [vmem:[%s340 + $0x168] sm:%s332] %v387
                %v389 = vld [vmem:[%s339 + $0xc0] sm:%s332]
                %390 = vst [vmem:[%s340 + $0x180] sm:%s332] %v389
                %v391 = vld [vmem:[%s339 + $0xc8] sm:%s332]
                %392 = vst [vmem:[%s340 + $0x188] sm:%s332] %v391
                %v393 = vld [vmem:[%s339 + $0xd0] sm:%s332]
                %394 = vst [vmem:[%s340 + $0x1a0] sm:%s332] %v393
                %v395 = vld [vmem:[%s339 + $0xd8] sm:%s332]
                %396 = vst [vmem:[%s340 + $0x1a8] sm:%s332] %v395
                %v397 = vld [vmem:[%s339 + $0xe0] sm:%s332]
                %398 = vst [vmem:[%s340 + $0x1c0] sm:%s332] %v397
                %v399 = vld [vmem:[%s339 + $0xe8] sm:%s332]
                %400 = vst [vmem:[%s340 + $0x1c8] sm:%s332] %v399
                %v401 = vld [vmem:[%s339 + $0xf0] sm:%s332]
                %402 = vst [vmem:[%s340 + $0x1e0] sm:%s332] %v401
                %v403 = vld [vmem:[%s339 + $0xf8] sm:%s332]
                %404 = vst [vmem:[%s340 + $0x1e8] sm:%s332] %v403
              $region83: #{sh_encode_from_planar.1} parent=77 // loop_footer
                %s338 = sadd.s32 1, %s334
              $region84: #{sh_encode_from_planar.1} parent=77 // loop_footer_branch
                %333 = sbr.rel target = $region80
              $region85: #{sh_encode_from_planar.1} parent=77 // loop_exit
                _
            $region78: #{sh_encode_from_planar.1} parent=69 // pred_fallthru
              _
          $region70: #{sh_encode_from_planar.1} parent=65 // pred_fallthru
            _
          %481 = vnop
        $region66: #{sh_encode_from_planar.1} parent=57 // pred_fallthru
          _
      $region58: #{sh_encode_from_planar.1} parent=5 // pred_fallthru
        _
      %p482 = scmp.le.s32.totalorder 2, %s7
      // Predicated region
      $region101: #{sh_encode_from_planar.1} parent=5 // pred_check
        %p483 = pneg %p482
      $region102: #{sh_encode_from_planar.1} parent=5 // pred_check_branch
        %485 = sbr.rel (%p483) target = $region104
      $region103: #{sh_encode_from_planar.1} parent=5 // pred_region
        %s486 = ssub.s32 %s7, 2
        // Predicated region
        $region105: #{sh_encode_from_planar.1} parent=103 // pred_check
          %p487 = pneg %p62
        $region106: #{sh_encode_from_planar.1} parent=103 // pred_check_branch
          %489 = sbr.rel (%p487) target = $region108
        $region107: #{sh_encode_from_planar.1} parent=103 // pred_region
          %s490 = sand.u32 %s47, 1
          %s491 = sand.u32 %s47, 1
          %s492 = smul.addr %s491, 256
          %s493 = scalar_lea.vmem [#allocation3], %s492
        $region108: #{sh_encode_from_planar.1} parent=103 // pred_fallthru
          _
      $region104: #{sh_encode_from_planar.1} parent=5 // pred_fallthru
        _
    $region6: #{sh_encode_from_planar.1} parent=1 // loop_footer
      %s11 = sadd.s32 1, %s7
    $region7: #{sh_encode_from_planar.1} parent=1 // loop_footer_branch
      %6 = sbr.rel target = $region3
    $region8: #{sh_encode_from_planar.1} parent=1 // loop_exit
      _

</llo_original>
